<compile_context>
chip_gen: v7x
topology: tpu7x:2x2x1
jax: 0.10.0
libtpu: 0.0.40
codegen_flags: <defaults>
</compile_context>

<pallas_src>
import jax
import jax.numpy as jnp
from jax import lax
from jax.experimental import pallas as pl
from jax.experimental.pallas import tpu as pltpu

# Contract the last dim of both operands: A (m, k) x B (n, k) -> A @ B^T = (m, n).
_CONTRACT_LAST = (((1,), (1,)), ((), ()))
# Contract A's last dim with B's first dim: A (m, k) x B (k, n) -> A @ B = (m, n).
_CONTRACT_INNER = (((1,), (0,)), ((), ()))


def _lstm_kernel(xflat_ref, wiht_ref, whh_ref, b_ref, wl_ref, bl_ref, out_ref):
    """Batched LSTM recurrence + final Linear in one kernel invocation.

    xflat_ref: (seq_len*B, input_size) f32  time-major inputs (row = t*B + b)
    wiht_ref:  (input_size, 4H)        f32  w_ih^T with the g-gate columns pre-scaled by 2
    whh_ref:   (4H, H)                 bf16 w_hh with the g-gate rows pre-scaled by 2
    b_ref:     (1, 4H)                 f32  (b_ih + b_hh) with the g-gate entries pre-scaled
    wl_ref:    (out, H)                f32  Linear weight (untransposed)
    bl_ref:    (1, out)                f32  Linear bias
    out_ref:   (B, out)                f32  prediction at the last timestep, per sequence
    """
    seq_b, input_size = xflat_ref.shape
    hidden = whh_ref.shape[1]
    batch, out_size = out_ref.shape
    seq_len = seq_b // batch

    # --- Prologue: hoisted input projection + bias for ALL timesteps. ---
    xflat = xflat_ref[...]
    wiht = wiht_ref[...]
    if input_size == 1:
        # K=1 "matmul" is an outer product: a single VPU broadcast multiply, no MXU.
        xproj = xflat * wiht + b_ref[...]                          # (seq*B, 4H) f32
    else:
        xproj = lax.dot_general(
            xflat, wiht, _CONTRACT_INNER,
            preferred_element_type=jnp.float32) + b_ref[...]       # (seq*B, 4H) f32

    whh = whh_ref[...]                                             # (4H, H) bf16

    # --- Recurrence: fully unrolled (seq_len is static); only h @ whh^T is on the chain. ---
    h = jnp.zeros((batch, hidden), jnp.float32)
    c = jnp.zeros((batch, hidden), jnp.float32)
    for t in range(seq_len):
        xg = xproj[t * batch:(t + 1) * batch, :]                   # static, vreg-aligned slice
        if t == 0:
            gates = xg                                             # h == 0: skip the matmul
        else:
            gates = xg + lax.dot_general(
                h.astype(jnp.bfloat16), whh, _CONTRACT_LAST,
                preferred_element_type=jnp.float32)                # (B, 4H) f32

        # ONE EUP pass over the whole (B, 4H) vreg.  The g block was pre-scaled by 2 in the
        # wrapper, so tanh(g_pre) == 2*sigmoid(2*g_pre) - 1 is recovered on the VPU.
        sig = jax.nn.sigmoid(gates)
        i_g = sig[:, 0 * hidden:1 * hidden]
        f_g = sig[:, 1 * hidden:2 * hidden]
        g_g = 2.0 * sig[:, 2 * hidden:3 * hidden] - 1.0
        o_g = sig[:, 3 * hidden:4 * hidden]

        c = f_g * c + i_g * g_g
        h = o_g * jnp.tanh(c)                                      # second (and last) EUP push

    # --- Epilogue: final Linear on the last hidden state. ---
    if out_size == 1:
        # 32-MAC dot product: VPU multiply + lane reduce, no MXU push at the end of the chain.
        out_ref[...] = (jnp.sum(h * wl_ref[...], axis=-1, keepdims=True)
                        + bl_ref[...])
    else:
        out_ref[...] = lax.dot_general(
            h.astype(jnp.bfloat16), wl_ref[...].astype(jnp.bfloat16), _CONTRACT_LAST,
            preferred_element_type=jnp.float32) + bl_ref[...]


def lstm_forward_batched(x, params):
    """x: (B, seq_len, input_size) f32.  Returns (B, output_size): predictions[-1] per row."""
    w_ih, w_hh, b_ih, b_hh, w_lin, b_lin = params
    batch, seq_len, input_size = x.shape
    hidden = w_hh.shape[1]
    out_size = w_lin.shape[0]

    # Fold the tanh(x) = 2*sigmoid(2x) - 1 prescale into the g-gate block of the packed 4H
    # axis so the kernel needs only one sigmoid over the full gates vector per step.
    # (Scaling by 2 in f32 before the bf16 cast is exact.)
    g_scale = jnp.concatenate([
        jnp.ones((2 * hidden,), jnp.float32),
        jnp.full((hidden,), 2.0, jnp.float32),
        jnp.ones((hidden,), jnp.float32)])

    wiht = (w_ih * g_scale[:, None]).T.astype(jnp.float32)         # (input_size, 4H)
    whh_bf = (w_hh * g_scale[:, None]).astype(jnp.bfloat16)        # (4H, H) bf16 MXU operand
    bias = ((b_ih + b_hh) * g_scale).reshape(1, 4 * hidden).astype(jnp.float32)
    wl = w_lin.astype(jnp.float32)                                 # (out, H)
    bl = b_lin.reshape(1, out_size).astype(jnp.float32)

    # Time-major flatten so each timestep is a contiguous (B, input) row block -> the kernel
    # slices xproj with static, sublane-aligned offsets.
    xflat = jnp.transpose(x, (1, 0, 2)).reshape(seq_len * batch, input_size)

    operands = (xflat, wiht, whh_bf, bias, wl, bl)
    operand_bytes = sum(int(a.size) * a.dtype.itemsize for a in operands)
    # VMEM residency guard: include the (seq*B, 4H) f32 xproj scratch and a generous allowance
    # for activation temporaries / double-buffering, not just operand bytes.  16 MiB keeps us
    # inside every generation's default scoped VMEM (v5e: 16, v6e: 32, v7x: 32 of 64 MiB
    # physical).  For large H or long seq, tile the 4H / seq axes with a BlockSpec grid.
    xproj_bytes = seq_len * batch * 4 * hidden * 4
    temp_bytes = 64 * 4096                                         # vreg-sized temporaries
    vmem_bytes_est = 2 * operand_bytes + xproj_bytes + temp_bytes + batch * out_size * 4
    assert vmem_bytes_est < 16 * 1024 * 1024, (
        "Whole-array VMEM residency unsafe at this size; tile the 4H / seq axes instead.")

    flops = (2 * seq_len * batch * input_size * 4 * hidden   # input projection (prologue)
             + 2 * (seq_len - 1) * batch * hidden * 4 * hidden  # recurrent matmuls
             + 2 * batch * hidden * out_size)                 # final linear
    transcendentals = seq_len * batch * (4 * hidden + hidden)  # sigmoid(4H) + tanh(H) per step
    bytes_accessed = operand_bytes + batch * out_size * 4

    vmem = pl.BlockSpec(memory_space=pltpu.MemorySpace.VMEM)
    return pl.pallas_call(
        _lstm_kernel,
        out_shape=jax.ShapeDtypeStruct((batch, out_size), jnp.float32),
        in_specs=[vmem] * 6,
        out_specs=vmem,
        cost_estimate=pl.CostEstimate(
            flops=flops,
            transcendentals=transcendentals,
            bytes_accessed=bytes_accessed),
    )(*operands)


def lstm_forward(x, params):
    """Module-equivalent single-sequence forward.

    x: (seq_len, input_size) f32.  Returns (output_size,) == predictions[-1].
    """
    return lstm_forward_batched(x[None], params)[0]


def lstm_reference(x, params):
    """Pure-JAX f32 reference matching torch.nn.LSTM + nn.Linear, predictions[-1]."""
    w_ih, w_hh, b_ih, b_hh, w_lin, b_lin = params
    hidden = w_hh.shape[1]

    def step(carry, x_t):
        h, c = carry
        gates = x_t @ w_ih.T + b_ih + h @ w_hh.T + b_hh
        i_g = jax.nn.sigmoid(gates[0 * hidden:1 * hidden])
        f_g = jax.nn.sigmoid(gates[1 * hidden:2 * hidden])
        g_g = jnp.tanh(gates[2 * hidden:3 * hidden])
        o_g = jax.nn.sigmoid(gates[3 * hidden:4 * hidden])
        c_new = f_g * c + i_g * g_g
        h_new = o_g * jnp.tanh(c_new)
        return (h_new, c_new), h_new

    h0 = jnp.zeros((hidden,), jnp.float32)
    c0 = jnp.zeros((hidden,), jnp.float32)
    (_, _), hs = lax.scan(step, (h0, c0), x)
    return hs[-1] @ w_lin.T + b_lin


def init_params(key, input_size, hidden, output_size):
    # PyTorch init: uniform(-1/sqrt(H), 1/sqrt(H)) for both LSTM and Linear params.
    k = 1.0 / jnp.sqrt(jnp.float32(hidden))
    keys = jax.random.split(key, 6)
    w_ih = jax.random.uniform(keys[0], (4 * hidden, input_size), jnp.float32, -k, k)
    w_hh = jax.random.uniform(keys[1], (4 * hidden, hidden), jnp.float32, -k, k)
    b_ih = jax.random.uniform(keys[2], (4 * hidden,), jnp.float32, -k, k)
    b_hh = jax.random.uniform(keys[3], (4 * hidden,), jnp.float32, -k, k)
    w_lin = jax.random.uniform(keys[4], (output_size, hidden), jnp.float32, -k, k)
    b_lin = jax.random.uniform(keys[5], (output_size,), jnp.float32, -k, k)
    return (w_ih, w_hh, b_ih, b_hh, w_lin, b_lin)


if __name__ == "__main__":
    batch, seq_len, input_size, hidden, output_size = 8, 8, 1, 32, 1

    key = jax.random.PRNGKey(0)
    k_x, k_p = jax.random.split(key)
    x = jax.random.normal(k_x, (batch, seq_len, input_size), jnp.float32)
    params = init_params(k_p, input_size, hidden, output_size)

    # Batched kernel: B independent module forwards in one call (sublane-batched).
    pred = jax.block_until_ready(lstm_forward_batched(x, params))
    ref = jnp.stack([lstm_reference(x[b], params) for b in range(batch)])
    assert pred.shape == (batch, output_size), pred.shape
    # Tolerance loosened vs. pure-f32 because recurrent weights are bf16 on the MXU.
    assert jnp.allclose(pred, ref, rtol=3e-2, atol=3e-2), (pred, ref)

    # Module-equivalent single-sequence path (same kernel, B=1).
    pred1 = jax.block_until_ready(lstm_forward(x[0], params))
    assert pred1.shape == (output_size,), pred1.shape
    assert jnp.allclose(pred1, ref[0], rtol=3e-2, atol=3e-2), (pred1, ref[0])

    print("KERNEL_OK")
</pallas_src>

<mosaic_0001>
module attributes {stable_mosaic.version = 11 : i64} {
  func.func @_lstm_kernel(%arg0: memref<64x1xf32, #tpu.memory_space<vmem>>, %arg1: memref<1x128xf32, #tpu.memory_space<vmem>>, %arg2: memref<128x32xbf16, #tpu.memory_space<vmem>>, %arg3: memref<1x128xf32, #tpu.memory_space<vmem>>, %arg4: memref<1x32xf32, #tpu.memory_space<vmem>>, %arg5: memref<1x1xf32, #tpu.memory_space<vmem>>, %arg6: memref<8x1xf32, #tpu.memory_space<vmem>>) attributes {dimension_semantics = [], scalar_prefetch = 0 : i64, scratch_operands = 0 : i64, tpu.core_type = #tpu.core_type<tc>} {
    %c0 = arith.constant 0 : index
    %c0_0 = arith.constant 0 : index
    %0 = vector.load %arg0[%c0, %c0_0] : memref<64x1xf32, #tpu.memory_space<vmem>>, vector<64x1xf32>
    %c0_1 = arith.constant 0 : index
    %c0_2 = arith.constant 0 : index
    %1 = vector.load %arg1[%c0_1, %c0_2] : memref<1x128xf32, #tpu.memory_space<vmem>>, vector<1x128xf32>
    %2 = vector.broadcast %0 : vector<64x1xf32> to vector<64x128xf32>
    %3 = vector.broadcast %1 : vector<1x128xf32> to vector<64x128xf32>
    %4 = arith.mulf %2, %3 : vector<64x128xf32>
    %c0_3 = arith.constant 0 : index
    %c0_4 = arith.constant 0 : index
    %5 = vector.load %arg3[%c0_3, %c0_4] : memref<1x128xf32, #tpu.memory_space<vmem>>, vector<1x128xf32>
    %6 = vector.broadcast %5 : vector<1x128xf32> to vector<64x128xf32>
    %7 = arith.addf %4, %6 : vector<64x128xf32>
    %c0_5 = arith.constant 0 : index
    %c0_6 = arith.constant 0 : index
    %8 = vector.load %arg2[%c0_5, %c0_6] : memref<128x32xbf16, #tpu.memory_space<vmem>>, vector<128x32xbf16>
    %cst = arith.constant 0.000000e+00 : f32
    %9 = vector.broadcast %cst : f32 to vector<8x32xf32>
    %10 = vector.extract_strided_slice %7 {offsets = [0, 0], sizes = [8, 128], strides = [1, 1]} : vector<64x128xf32> to vector<8x128xf32>
    %11 = arith.negf %10 : vector<8x128xf32>
    %12 = math.exp %11 : vector<8x128xf32>
    %cst_7 = arith.constant 1.000000e+00 : f32
    %13 = vector.broadcast %cst_7 : f32 to vector<8x128xf32>
    %14 = arith.addf %13, %12 : vector<8x128xf32>
    %15 = arith.divf %13, %14 : vector<8x128xf32>
    %16 = vector.extract_strided_slice %15 {offsets = [0, 0], sizes = [8, 32], strides = [1, 1]} : vector<8x128xf32> to vector<8x32xf32>
    %17 = vector.extract_strided_slice %15 {offsets = [0, 32], sizes = [8, 32], strides = [1, 1]} : vector<8x128xf32> to vector<8x32xf32>
    %18 = vector.extract_strided_slice %15 {offsets = [0, 64], sizes = [8, 32], strides = [1, 1]} : vector<8x128xf32> to vector<8x32xf32>
    %cst_8 = arith.constant 2.000000e+00 : f32
    %19 = vector.broadcast %cst_8 : f32 to vector<8x32xf32>
    %20 = arith.mulf %19, %18 : vector<8x32xf32>
    %cst_9 = arith.constant 1.000000e+00 : f32
    %21 = vector.broadcast %cst_9 : f32 to vector<8x32xf32>
    %22 = arith.subf %20, %21 : vector<8x32xf32>
    %23 = vector.extract_strided_slice %15 {offsets = [0, 96], sizes = [8, 32], strides = [1, 1]} : vector<8x128xf32> to vector<8x32xf32>
    %24 = arith.mulf %17, %9 : vector<8x32xf32>
    %25 = arith.mulf %16, %22 : vector<8x32xf32>
    %26 = arith.addf %24, %25 : vector<8x32xf32>
    %27 = math.tanh %26 : vector<8x32xf32>
    %28 = arith.mulf %23, %27 : vector<8x32xf32>
    %29 = vector.extract_strided_slice %7 {offsets = [8, 0], sizes = [8, 128], strides = [1, 1]} : vector<64x128xf32> to vector<8x128xf32>
    %30 = arith.truncf %28 : vector<8x32xf32> to vector<8x32xbf16>
    %cst_10 = arith.constant dense<0.000000e+00> : vector<8x128xf32>
    %31 = tpu.matmul %30, %8, %cst_10 {dimension_numbers = #tpu.dot_dimension_numbers<[1], [1], [0], [0], [0, 0, 1, 0], [], []>} : vector<8x32xbf16>, vector<128x32xbf16>, vector<8x128xf32> -> vector<8x128xf32>
    %32 = arith.addf %29, %31 : vector<8x128xf32>
    %33 = arith.negf %32 : vector<8x128xf32>
    %34 = math.exp %33 : vector<8x128xf32>
    %cst_11 = arith.constant 1.000000e+00 : f32
    %35 = vector.broadcast %cst_11 : f32 to vector<8x128xf32>
    %36 = arith.addf %35, %34 : vector<8x128xf32>
    %37 = arith.divf %35, %36 : vector<8x128xf32>
    %38 = vector.extract_strided_slice %37 {offsets = [0, 0], sizes = [8, 32], strides = [1, 1]} : vector<8x128xf32> to vector<8x32xf32>
    %39 = vector.extract_strided_slice %37 {offsets = [0, 32], sizes = [8, 32], strides = [1, 1]} : vector<8x128xf32> to vector<8x32xf32>
    %40 = vector.extract_strided_slice %37 {offsets = [0, 64], sizes = [8, 32], strides = [1, 1]} : vector<8x128xf32> to vector<8x32xf32>
    %cst_12 = arith.constant 2.000000e+00 : f32
    %41 = vector.broadcast %cst_12 : f32 to vector<8x32xf32>
    %42 = arith.mulf %41, %40 : vector<8x32xf32>
    %cst_13 = arith.constant 1.000000e+00 : f32
    %43 = vector.broadcast %cst_13 : f32 to vector<8x32xf32>
    %44 = arith.subf %42, %43 : vector<8x32xf32>
    %45 = vector.extract_strided_slice %37 {offsets = [0, 96], sizes = [8, 32], strides = [1, 1]} : vector<8x128xf32> to vector<8x32xf32>
    %46 = arith.mulf %39, %26 : vector<8x32xf32>
    %47 = arith.mulf %38, %44 : vector<8x32xf32>
    %48 = arith.addf %46, %47 : vector<8x32xf32>
    %49 = math.tanh %48 : vector<8x32xf32>
    %50 = arith.mulf %45, %49 : vector<8x32xf32>
    %51 = vector.extract_strided_slice %7 {offsets = [16, 0], sizes = [8, 128], strides = [1, 1]} : vector<64x128xf32> to vector<8x128xf32>
    %52 = arith.truncf %50 : vector<8x32xf32> to vector<8x32xbf16>
    %cst_14 = arith.constant dense<0.000000e+00> : vector<8x128xf32>
    %53 = tpu.matmul %52, %8, %cst_14 {dimension_numbers = #tpu.dot_dimension_numbers<[1], [1], [0], [0], [0, 0, 1, 0], [], []>} : vector<8x32xbf16>, vector<128x32xbf16>, vector<8x128xf32> -> vector<8x128xf32>
    %54 = arith.addf %51, %53 : vector<8x128xf32>
    %55 = arith.negf %54 : vector<8x128xf32>
    %56 = math.exp %55 : vector<8x128xf32>
    %cst_15 = arith.constant 1.000000e+00 : f32
    %57 = vector.broadcast %cst_15 : f32 to vector<8x128xf32>
    %58 = arith.addf %57, %56 : vector<8x128xf32>
    %59 = arith.divf %57, %58 : vector<8x128xf32>
    %60 = vector.extract_strided_slice %59 {offsets = [0, 0], sizes = [8, 32], strides = [1, 1]} : vector<8x128xf32> to vector<8x32xf32>
    %61 = vector.extract_strided_slice %59 {offsets = [0, 32], sizes = [8, 32], strides = [1, 1]} : vector<8x128xf32> to vector<8x32xf32>
    %62 = vector.extract_strided_slice %59 {offsets = [0, 64], sizes = [8, 32], strides = [1, 1]} : vector<8x128xf32> to vector<8x32xf32>
    %cst_16 = arith.constant 2.000000e+00 : f32
    %63 = vector.broadcast %cst_16 : f32 to vector<8x32xf32>
    %64 = arith.mulf %63, %62 : vector<8x32xf32>
    %cst_17 = arith.constant 1.000000e+00 : f32
    %65 = vector.broadcast %cst_17 : f32 to vector<8x32xf32>
    %66 = arith.subf %64, %65 : vector<8x32xf32>
    %67 = vector.extract_strided_slice %59 {offsets = [0, 96], sizes = [8, 32], strides = [1, 1]} : vector<8x128xf32> to vector<8x32xf32>
    %68 = arith.mulf %61, %48 : vector<8x32xf32>
    %69 = arith.mulf %60, %66 : vector<8x32xf32>
    %70 = arith.addf %68, %69 : vector<8x32xf32>
    %71 = math.tanh %70 : vector<8x32xf32>
    %72 = arith.mulf %67, %71 : vector<8x32xf32>
    %73 = vector.extract_strided_slice %7 {offsets = [24, 0], sizes = [8, 128], strides = [1, 1]} : vector<64x128xf32> to vector<8x128xf32>
    %74 = arith.truncf %72 : vector<8x32xf32> to vector<8x32xbf16>
    %cst_18 = arith.constant dense<0.000000e+00> : vector<8x128xf32>
    %75 = tpu.matmul %74, %8, %cst_18 {dimension_numbers = #tpu.dot_dimension_numbers<[1], [1], [0], [0], [0, 0, 1, 0], [], []>} : vector<8x32xbf16>, vector<128x32xbf16>, vector<8x128xf32> -> vector<8x128xf32>
    %76 = arith.addf %73, %75 : vector<8x128xf32>
    %77 = arith.negf %76 : vector<8x128xf32>
    %78 = math.exp %77 : vector<8x128xf32>
    %cst_19 = arith.constant 1.000000e+00 : f32
    %79 = vector.broadcast %cst_19 : f32 to vector<8x128xf32>
    %80 = arith.addf %79, %78 : vector<8x128xf32>
    %81 = arith.divf %79, %80 : vector<8x128xf32>
    %82 = vector.extract_strided_slice %81 {offsets = [0, 0], sizes = [8, 32], strides = [1, 1]} : vector<8x128xf32> to vector<8x32xf32>
    %83 = vector.extract_strided_slice %81 {offsets = [0, 32], sizes = [8, 32], strides = [1, 1]} : vector<8x128xf32> to vector<8x32xf32>
    %84 = vector.extract_strided_slice %81 {offsets = [0, 64], sizes = [8, 32], strides = [1, 1]} : vector<8x128xf32> to vector<8x32xf32>
    %cst_20 = arith.constant 2.000000e+00 : f32
    %85 = vector.broadcast %cst_20 : f32 to vector<8x32xf32>
    %86 = arith.mulf %85, %84 : vector<8x32xf32>
    %cst_21 = arith.constant 1.000000e+00 : f32
    %87 = vector.broadcast %cst_21 : f32 to vector<8x32xf32>
    %88 = arith.subf %86, %87 : vector<8x32xf32>
    %89 = vector.extract_strided_slice %81 {offsets = [0, 96], sizes = [8, 32], strides = [1, 1]} : vector<8x128xf32> to vector<8x32xf32>
    %90 = arith.mulf %83, %70 : vector<8x32xf32>
    %91 = arith.mulf %82, %88 : vector<8x32xf32>
    %92 = arith.addf %90, %91 : vector<8x32xf32>
    %93 = math.tanh %92 : vector<8x32xf32>
    %94 = arith.mulf %89, %93 : vector<8x32xf32>
    %95 = vector.extract_strided_slice %7 {offsets = [32, 0], sizes = [8, 128], strides = [1, 1]} : vector<64x128xf32> to vector<8x128xf32>
    %96 = arith.truncf %94 : vector<8x32xf32> to vector<8x32xbf16>
    %cst_22 = arith.constant dense<0.000000e+00> : vector<8x128xf32>
    %97 = tpu.matmul %96, %8, %cst_22 {dimension_numbers = #tpu.dot_dimension_numbers<[1], [1], [0], [0], [0, 0, 1, 0], [], []>} : vector<8x32xbf16>, vector<128x32xbf16>, vector<8x128xf32> -> vector<8x128xf32>
    %98 = arith.addf %95, %97 : vector<8x128xf32>
    %99 = arith.negf %98 : vector<8x128xf32>
    %100 = math.exp %99 : vector<8x128xf32>
    %cst_23 = arith.constant 1.000000e+00 : f32
    %101 = vector.broadcast %cst_23 : f32 to vector<8x128xf32>
    %102 = arith.addf %101, %100 : vector<8x128xf32>
    %103 = arith.divf %101, %102 : vector<8x128xf32>
    %104 = vector.extract_strided_slice %103 {offsets = [0, 0], sizes = [8, 32], strides = [1, 1]} : vector<8x128xf32> to vector<8x32xf32>
    %105 = vector.extract_strided_slice %103 {offsets = [0, 32], sizes = [8, 32], strides = [1, 1]} : vector<8x128xf32> to vector<8x32xf32>
    %106 = vector.extract_strided_slice %103 {offsets = [0, 64], sizes = [8, 32], strides = [1, 1]} : vector<8x128xf32> to vector<8x32xf32>
    %cst_24 = arith.constant 2.000000e+00 : f32
    %107 = vector.broadcast %cst_24 : f32 to vector<8x32xf32>
    %108 = arith.mulf %107, %106 : vector<8x32xf32>
    %cst_25 = arith.constant 1.000000e+00 : f32
    %109 = vector.broadcast %cst_25 : f32 to vector<8x32xf32>
    %110 = arith.subf %108, %109 : vector<8x32xf32>
    %111 = vector.extract_strided_slice %103 {offsets = [0, 96], sizes = [8, 32], strides = [1, 1]} : vector<8x128xf32> to vector<8x32xf32>
    %112 = arith.mulf %105, %92 : vector<8x32xf32>
    %113 = arith.mulf %104, %110 : vector<8x32xf32>
    %114 = arith.addf %112, %113 : vector<8x32xf32>
    %115 = math.tanh %114 : vector<8x32xf32>
    %116 = arith.mulf %111, %115 : vector<8x32xf32>
    %117 = vector.extract_strided_slice %7 {offsets = [40, 0], sizes = [8, 128], strides = [1, 1]} : vector<64x128xf32> to vector<8x128xf32>
    %118 = arith.truncf %116 : vector<8x32xf32> to vector<8x32xbf16>
    %cst_26 = arith.constant dense<0.000000e+00> : vector<8x128xf32>
    %119 = tpu.matmul %118, %8, %cst_26 {dimension_numbers = #tpu.dot_dimension_numbers<[1], [1], [0], [0], [0, 0, 1, 0], [], []>} : vector<8x32xbf16>, vector<128x32xbf16>, vector<8x128xf32> -> vector<8x128xf32>
    %120 = arith.addf %117, %119 : vector<8x128xf32>
    %121 = arith.negf %120 : vector<8x128xf32>
    %122 = math.exp %121 : vector<8x128xf32>
    %cst_27 = arith.constant 1.000000e+00 : f32
    %123 = vector.broadcast %cst_27 : f32 to vector<8x128xf32>
    %124 = arith.addf %123, %122 : vector<8x128xf32>
    %125 = arith.divf %123, %124 : vector<8x128xf32>
    %126 = vector.extract_strided_slice %125 {offsets = [0, 0], sizes = [8, 32], strides = [1, 1]} : vector<8x128xf32> to vector<8x32xf32>
    %127 = vector.extract_strided_slice %125 {offsets = [0, 32], sizes = [8, 32], strides = [1, 1]} : vector<8x128xf32> to vector<8x32xf32>
    %128 = vector.extract_strided_slice %125 {offsets = [0, 64], sizes = [8, 32], strides = [1, 1]} : vector<8x128xf32> to vector<8x32xf32>
    %cst_28 = arith.constant 2.000000e+00 : f32
    %129 = vector.broadcast %cst_28 : f32 to vector<8x32xf32>
    %130 = arith.mulf %129, %128 : vector<8x32xf32>
    %cst_29 = arith.constant 1.000000e+00 : f32
    %131 = vector.broadcast %cst_29 : f32 to vector<8x32xf32>
    %132 = arith.subf %130, %131 : vector<8x32xf32>
    %133 = vector.extract_strided_slice %125 {offsets = [0, 96], sizes = [8, 32], strides = [1, 1]} : vector<8x128xf32> to vector<8x32xf32>
    %134 = arith.mulf %127, %114 : vector<8x32xf32>
    %135 = arith.mulf %126, %132 : vector<8x32xf32>
    %136 = arith.addf %134, %135 : vector<8x32xf32>
    %137 = math.tanh %136 : vector<8x32xf32>
    %138 = arith.mulf %133, %137 : vector<8x32xf32>
    %139 = vector.extract_strided_slice %7 {offsets = [48, 0], sizes = [8, 128], strides = [1, 1]} : vector<64x128xf32> to vector<8x128xf32>
    %140 = arith.truncf %138 : vector<8x32xf32> to vector<8x32xbf16>
    %cst_30 = arith.constant dense<0.000000e+00> : vector<8x128xf32>
    %141 = tpu.matmul %140, %8, %cst_30 {dimension_numbers = #tpu.dot_dimension_numbers<[1], [1], [0], [0], [0, 0, 1, 0], [], []>} : vector<8x32xbf16>, vector<128x32xbf16>, vector<8x128xf32> -> vector<8x128xf32>
    %142 = arith.addf %139, %141 : vector<8x128xf32>
    %143 = arith.negf %142 : vector<8x128xf32>
    %144 = math.exp %143 : vector<8x128xf32>
    %cst_31 = arith.constant 1.000000e+00 : f32
    %145 = vector.broadcast %cst_31 : f32 to vector<8x128xf32>
    %146 = arith.addf %145, %144 : vector<8x128xf32>
    %147 = arith.divf %145, %146 : vector<8x128xf32>
    %148 = vector.extract_strided_slice %147 {offsets = [0, 0], sizes = [8, 32], strides = [1, 1]} : vector<8x128xf32> to vector<8x32xf32>
    %149 = vector.extract_strided_slice %147 {offsets = [0, 32], sizes = [8, 32], strides = [1, 1]} : vector<8x128xf32> to vector<8x32xf32>
    %150 = vector.extract_strided_slice %147 {offsets = [0, 64], sizes = [8, 32], strides = [1, 1]} : vector<8x128xf32> to vector<8x32xf32>
    %cst_32 = arith.constant 2.000000e+00 : f32
    %151 = vector.broadcast %cst_32 : f32 to vector<8x32xf32>
    %152 = arith.mulf %151, %150 : vector<8x32xf32>
    %cst_33 = arith.constant 1.000000e+00 : f32
    %153 = vector.broadcast %cst_33 : f32 to vector<8x32xf32>
    %154 = arith.subf %152, %153 : vector<8x32xf32>
    %155 = vector.extract_strided_slice %147 {offsets = [0, 96], sizes = [8, 32], strides = [1, 1]} : vector<8x128xf32> to vector<8x32xf32>
    %156 = arith.mulf %149, %136 : vector<8x32xf32>
    %157 = arith.mulf %148, %154 : vector<8x32xf32>
    %158 = arith.addf %156, %157 : vector<8x32xf32>
    %159 = math.tanh %158 : vector<8x32xf32>
    %160 = arith.mulf %155, %159 : vector<8x32xf32>
    %161 = vector.extract_strided_slice %7 {offsets = [56, 0], sizes = [8, 128], strides = [1, 1]} : vector<64x128xf32> to vector<8x128xf32>
    %162 = arith.truncf %160 : vector<8x32xf32> to vector<8x32xbf16>
    %cst_34 = arith.constant dense<0.000000e+00> : vector<8x128xf32>
    %163 = tpu.matmul %162, %8, %cst_34 {dimension_numbers = #tpu.dot_dimension_numbers<[1], [1], [0], [0], [0, 0, 1, 0], [], []>} : vector<8x32xbf16>, vector<128x32xbf16>, vector<8x128xf32> -> vector<8x128xf32>
    %164 = arith.addf %161, %163 : vector<8x128xf32>
    %165 = arith.negf %164 : vector<8x128xf32>
    %166 = math.exp %165 : vector<8x128xf32>
    %cst_35 = arith.constant 1.000000e+00 : f32
    %167 = vector.broadcast %cst_35 : f32 to vector<8x128xf32>
    %168 = arith.addf %167, %166 : vector<8x128xf32>
    %169 = arith.divf %167, %168 : vector<8x128xf32>
    %170 = vector.extract_strided_slice %169 {offsets = [0, 0], sizes = [8, 32], strides = [1, 1]} : vector<8x128xf32> to vector<8x32xf32>
    %171 = vector.extract_strided_slice %169 {offsets = [0, 32], sizes = [8, 32], strides = [1, 1]} : vector<8x128xf32> to vector<8x32xf32>
    %172 = vector.extract_strided_slice %169 {offsets = [0, 64], sizes = [8, 32], strides = [1, 1]} : vector<8x128xf32> to vector<8x32xf32>
    %cst_36 = arith.constant 2.000000e+00 : f32
    %173 = vector.broadcast %cst_36 : f32 to vector<8x32xf32>
    %174 = arith.mulf %173, %172 : vector<8x32xf32>
    %cst_37 = arith.constant 1.000000e+00 : f32
    %175 = vector.broadcast %cst_37 : f32 to vector<8x32xf32>
    %176 = arith.subf %174, %175 : vector<8x32xf32>
    %177 = vector.extract_strided_slice %169 {offsets = [0, 96], sizes = [8, 32], strides = [1, 1]} : vector<8x128xf32> to vector<8x32xf32>
    %178 = arith.mulf %171, %158 : vector<8x32xf32>
    %179 = arith.mulf %170, %176 : vector<8x32xf32>
    %180 = arith.addf %178, %179 : vector<8x32xf32>
    %181 = math.tanh %180 : vector<8x32xf32>
    %182 = arith.mulf %177, %181 : vector<8x32xf32>
    %c0_38 = arith.constant 0 : index
    %c0_39 = arith.constant 0 : index
    %183 = vector.load %arg4[%c0_38, %c0_39] : memref<1x32xf32, #tpu.memory_space<vmem>>, vector<1x32xf32>
    %184 = vector.broadcast %183 : vector<1x32xf32> to vector<8x32xf32>
    %185 = arith.mulf %182, %184 : vector<8x32xf32>
    %cst_40 = arith.constant dense<0.000000e+00> : vector<8xf32>
    %186 = vector.multi_reduction <add>, %185, %cst_40 [1] : vector<8x32xf32> to vector<8xf32>
    %187 = vector.shape_cast %186 : vector<8xf32> to vector<8x1xf32>
    %c0_41 = arith.constant 0 : index
    %c0_42 = arith.constant 0 : index
    %188 = vector.load %arg5[%c0_41, %c0_42] : memref<1x1xf32, #tpu.memory_space<vmem>>, vector<1x1xf32>
    %189 = vector.broadcast %188 : vector<1x1xf32> to vector<8x1xf32>
    %190 = arith.addf %187, %189 : vector<8x1xf32>
    %c0_43 = arith.constant 0 : index
    %c0_44 = arith.constant 0 : index
    %191 = vector.load %arg6[%c0_43, %c0_44] : memref<8x1xf32, #tpu.memory_space<vmem>>, vector<8x1xf32>
    tpu.vector_store %arg6[%c0_43, %c0_44], %190 {strides = array<i32>} : memref<8x1xf32, #tpu.memory_space<vmem>>, vector<8x1xf32>,
    return
  }
}

</mosaic_0001>

<llo_original>
// kernel: tpu_custom_call.1
$region0: #{tpu_custom_call.1}
  #allocation0 [shape = 'u32[]', space=smem, size = 0x4, offset = 0x4, fixed_abs, tag = 'smem constant byte address 0x4 - core index']
  #allocation1 [shape = 'u32[144,128]{1,0:T(1,128)}', space=vmem, size = 0x12000, scoped, tag = 'internal scratch']
  #allocation2 [shape = 'f32[1,1]{1,0:T(1,128)S(1)}', space=vmem, size = 0x200, scoped, tag = 'scoped memory for tpu_custom_call.1']
  %s0 = inlined_call_operand.vmem [shape: f32[64,1], index: 0, kind: input, shape index: {}]
  %s1 = inlined_call_operand.vmem [shape: f32[1,128], index: 1, kind: input, shape index: {}]
  %s2 = inlined_call_operand.vmem [shape: bf16[128,32], index: 2, kind: input, shape index: {}]
  %s3 = inlined_call_operand.vmem [shape: f32[1,128], index: 3, kind: input, shape index: {}]
  %s4 = inlined_call_operand.vmem [shape: f32[1,32], index: 4, kind: input, shape index: {}]
  %s5 = inlined_call_operand.<no memory space> [shape: f32[1,1], index: 5, kind: input, shape index: {}]
  %s6 = inlined_call_operand.vmem [shape: f32[8,1], index: 6, kind: output, shape index: {}]
  %s7 = sld [smem:[#allocation0]]
  $region34: #{tpu_custom_call.1} parent=0
    _
  %s9 = ssub.s32 1, %s7
  %s10 = scalar_select 0, %s9, %s7
  %v11 = vstv %s5
  %12 = vst [vmem:[#allocation2] sm:$0x1] %v11
  // Predicated region
  $region2: #{tpu_custom_call.1} parent=0 // pred_check
    _
  $region3: #{tpu_custom_call.1} parent=0 // pred_check_branch
    %14 = sbr.rel (0) target = $region5
  $region4: #{tpu_custom_call.1} parent=0 // pred_region
    _
  $region5: #{tpu_custom_call.1} parent=0 // pred_fallthru
    _
  // Predicated region
  $region6: #{tpu_custom_call.1} parent=0 // pred_check
    _
  $region7: #{tpu_custom_call.1} parent=0 // pred_check_branch
    %16 = sbr.rel (0) target = $region9
  $region8: #{tpu_custom_call.1} parent=0 // pred_region
    _
  $region9: #{tpu_custom_call.1} parent=0 // pred_fallthru
    _
  // Predicated region
  $region10: #{tpu_custom_call.1} parent=0 // pred_check
    _
  $region11: #{tpu_custom_call.1} parent=0 // pred_check_branch
    %18 = sbr.rel (0) target = $region13
  $region12: #{tpu_custom_call.1} parent=0 // pred_region
    _
  $region13: #{tpu_custom_call.1} parent=0 // pred_fallthru
    _
  // Predicated region
  $region14: #{tpu_custom_call.1} parent=0 // pred_check
    _
  $region15: #{tpu_custom_call.1} parent=0 // pred_check_branch
    %20 = sbr.rel (0) target = $region17
  $region16: #{tpu_custom_call.1} parent=0 // pred_region
    _
  $region17: #{tpu_custom_call.1} parent=0 // pred_fallthru
    _
  // Predicated region
  $region18: #{tpu_custom_call.1} parent=0 // pred_check
    _
  $region19: #{tpu_custom_call.1} parent=0 // pred_check_branch
    %22 = sbr.rel (0) target = $region21
  $region20: #{tpu_custom_call.1} parent=0 // pred_region
    _
  $region21: #{tpu_custom_call.1} parent=0 // pred_fallthru
    _
  // Predicated region
  $region22: #{tpu_custom_call.1} parent=0 // pred_check
    _
  $region23: #{tpu_custom_call.1} parent=0 // pred_check_branch
    %24 = sbr.rel (0) target = $region25
  $region24: #{tpu_custom_call.1} parent=0 // pred_region
    _
  $region25: #{tpu_custom_call.1} parent=0 // pred_fallthru
    _
  %v26 = vld [vmem:[%s0] sm:$0xff]
  %v27 = vld [vmem:[%s0 + $0x8] sm:$0xff]
  %v28 = vld [vmem:[%s0 + $0x10] sm:$0xff]
  %v29 = vld [vmem:[%s0 + $0x18] sm:$0xff]
  %v30 = vld [vmem:[%s0 + $0x20] sm:$0xff]
  %v31 = vld [vmem:[%s0 + $0x28] sm:$0xff]
  %v32 = vld [vmem:[%s0 + $0x30] sm:$0xff]
  %v33 = vld [vmem:[%s0 + $0x38] sm:$0xff]
  %v34 = vld [vmem:[%s1] sm:$0x1]
  %36 = vset.pattern.permute.xlu0 0
  %37 = vperm.xlu0 %36, %v26
  %v38 = vpop.permute.xlu0 %37
  %41 = vset.pattern.permute.xlu0 0
  %42 = vperm.xlu0 %41, %v27
  %v43 = vpop.permute.xlu0 %42
  %46 = vset.pattern.permute.xlu0 0
  %47 = vperm.xlu0 %46, %v28
  %v48 = vpop.permute.xlu0 %47
  %51 = vset.pattern.permute.xlu0 0
  %52 = vperm.xlu0 %51, %v29
  %v53 = vpop.permute.xlu0 %52
  %56 = vset.pattern.permute.xlu0 0
  %57 = vperm.xlu0 %56, %v30
  %v58 = vpop.permute.xlu0 %57
  %61 = vset.pattern.permute.xlu0 0
  %62 = vperm.xlu0 %61, %v31
  %v63 = vpop.permute.xlu0 %62
  %66 = vset.pattern.permute.xlu0 0
  %67 = vperm.xlu0 %66, %v32
  %v68 = vpop.permute.xlu0 %67
  %71 = vset.pattern.permute.xlu0 0
  %72 = vperm.xlu0 %71, %v33
  %v73 = vpop.permute.xlu0 %72
  %v76 = vlaneseq
  %v77 = vshrl.u32 %v76, 7
  %v78 = vsub.s32 0, %v77
  %v79 = vrot.slane %v34, %v78
  %v81 = vmul.f32 %v38, %v79
  %v82 = vmul.f32 %v43, %v79
  %v83 = vmul.f32 %v48, %v79
  %v84 = vmul.f32 %v53, %v79
  %v85 = vmul.f32 %v58, %v79
  %v86 = vmul.f32 %v63, %v79
  %v87 = vmul.f32 %v68, %v79
  %v88 = vmul.f32 %v73, %v79
  %v89 = vld [vmem:[%s3] sm:$0x1]
  %v91 = vlaneseq
  %v92 = vshrl.u32 %v91, 7
  %v93 = vsub.s32 0, %v92
  %v94 = vrot.slane %v89, %v93
  %v96 = vadd.f32 %v81, %v94
  %v97 = vadd.f32 %v82, %v94
  %v98 = vadd.f32 %v83, %v94
  %v99 = vadd.f32 %v84, %v94
  %v100 = vadd.f32 %v85, %v94
  %v101 = vadd.f32 %v86, %v94
  %v102 = vadd.f32 %v87, %v94
  %v103 = vadd.f32 %v88, %v94
  %v104 = vld [vmem:[%s2] sm:$0xf]
  %v105 = vld [vmem:[%s2 + $0x4] sm:$0xf]
  %v106 = vld [vmem:[%s2 + $0x8] sm:$0xf]
  %v107 = vld [vmem:[%s2 + $0xc] sm:$0xf]
  %v108 = vld [vmem:[%s2 + $0x10] sm:$0xf]
  %v109 = vld [vmem:[%s2 + $0x14] sm:$0xf]
  %v110 = vld [vmem:[%s2 + $0x18] sm:$0xf]
  %v111 = vld [vmem:[%s2 + $0x1c] sm:$0xf]
  %v112 = vld [vmem:[%s2 + $0x20] sm:$0xf]
  %v113 = vld [vmem:[%s2 + $0x24] sm:$0xf]
  %v114 = vld [vmem:[%s2 + $0x28] sm:$0xf]
  %v115 = vld [vmem:[%s2 + $0x2c] sm:$0xf]
  %v116 = vld [vmem:[%s2 + $0x30] sm:$0xf]
  %v117 = vld [vmem:[%s2 + $0x34] sm:$0xf]
  %v118 = vld [vmem:[%s2 + $0x38] sm:$0xf]
  %v119 = vld [vmem:[%s2 + $0x3c] sm:$0xf]
  %v120 = vxor.u32 %v96, 2147483648
  %v121 = vmul.f32 %v120, 1.442695
  %v122 = vpow.pop %v121
  %v123 = vadd.f32 %v122, 1.0
  %v124 = vrcp.pop %v123
  %v125 = vmul.f32 1.0, %v124
  %v126 = vmul.f32 %v125, 2.0
  %v127 = vsub.f32 %v126, 1.0
  %v128 = vmul.f32 %v125, 0.0
  %130 = vrot.lane.b32.xlu0 %v127, 64
  %v131 = vpop.permute.xlu0 %130
  %v133 = vmul.f32 %v125, %v131
  %135 = vrot.lane.b32.xlu0 %v133, 32
  %v136 = vpop.permute.xlu0 %135
  %v138 = vadd.f32 %v128, %v136
  %v139 = vtanh.pop %v138
  %141 = vrot.lane.b32.xlu0 %v139, 64
  %v142 = vpop.permute.xlu0 %141
  %v144 = vmul.f32 %v125, %v142
  %v145 = vpack.c.bf16 %v144, %v144
  %147 = vrot.lane.b32.xlu0 %v145, 32
  %v148 = vpop.permute.xlu0 %147
  %v165 = vunpack.c.l.b16 %v104
  %v166 = vunpack.c.l.b16 %v105
  %v167 = vunpack.c.l.b16 %v106
  %v168 = vunpack.c.l.b16 %v107
  %v169 = vunpack.c.l.b16 %v108
  %v170 = vunpack.c.l.b16 %v109
  %v171 = vunpack.c.l.b16 %v110
  %v172 = vunpack.c.l.b16 %v111
  %v173 = vunpack.c.l.b16 %v112
  %v174 = vunpack.c.l.b16 %v113
  %v175 = vunpack.c.l.b16 %v114
  %v176 = vunpack.c.l.b16 %v115
  %v177 = vunpack.c.l.b16 %v116
  %v178 = vunpack.c.l.b16 %v117
  %v179 = vunpack.c.l.b16 %v118
  %v180 = vunpack.c.l.b16 %v119
  %v181 = vpack.c.b16 %v166, %v165
  %v182 = vpack.c.b16 %v168, %v167
  %v183 = vpack.c.b16 %v170, %v169
  %v184 = vpack.c.b16 %v172, %v171
  %v185 = vpack.c.b16 %v174, %v173
  %v186 = vpack.c.b16 %v176, %v175
  %v187 = vpack.c.b16 %v178, %v177
  %v188 = vpack.c.b16 %v180, %v179
  %vm189 = vcmask 261120
  %v191 = vsel %vm189, %v148, 0
  %v194 = vsel %vm189, %v181, 0
  %v197 = vsel %vm189, %v182, 0
  %v200 = vsel %vm189, %v183, 0
  %v203 = vsel %vm189, %v184, 0
  %v206 = vsel %vm189, %v185, 0
  %v209 = vsel %vm189, %v186, 0
  %v212 = vsel %vm189, %v187, 0
  %v215 = vsel %vm189, %v188, 0
  %217 = vmatprep.subr.bf16.mxu0 0
  %218 = vmatpush1.bf16.xpose.msra.mxu0 %v194
  %219 = vmatprep.subr.bf16.mxu0 0
  %220 = vmatpush1.bf16.xpose.msra.mxu0 %v197
  %221 = vmatprep.subr.bf16.mxu0 0
  %222 = vmatpush1.bf16.xpose.msra.mxu0 %v200
  %223 = vmatprep.subr.bf16.mxu0 0
  %224 = vmatpush1.bf16.xpose.msra.mxu0 %v203
  %225 = vmatprep.subr.bf16.mxu0 0
  %226 = vmatpush1.bf16.xpose.msra.mxu0 %v206
  %227 = vmatprep.subr.bf16.mxu0 0
  %228 = vmatpush1.bf16.xpose.msra.mxu0 %v209
  %229 = vmatprep.subr.bf16.mxu0 0
  %230 = vmatpush1.bf16.xpose.msra.mxu0 %v212
  %231 = vmatprep.subr.bf16.mxu0 0
  %232 = vmatpush1.bf16.xpose.msra.mxu0 %v215
  %233 = vmatprep.subr.bf16.mxu0 0
  %234 = vmatpush1.bf16.xpose.msra.mxu0 0
  %235 = vmatprep.subr.bf16.mxu0 0
  %236 = vmatpush1.bf16.xpose.msra.mxu0 0
  %237 = vmatprep.subr.bf16.mxu0 0
  %238 = vmatpush1.bf16.xpose.msra.mxu0 0
  %239 = vmatprep.subr.bf16.mxu0 0
  %240 = vmatpush1.bf16.xpose.msra.mxu0 0
  %241 = vmatprep.subr.bf16.mxu0 0
  %242 = vmatpush1.bf16.xpose.msra.mxu0 0
  %243 = vmatprep.subr.bf16.mxu0 0
  %244 = vmatpush1.bf16.xpose.msra.mxu0 0
  %245 = vmatprep.subr.bf16.mxu0 0
  %246 = vmatpush1.bf16.xpose.msra.mxu0 0
  %247 = vmatprep.subr.bf16.mxu0 0
  %248 = vmatpush1.bf16.xpose.msra.mxu0 0
  %249 = vmatprep.mubr.bf16.mxu0 0
  %250 = vmatmul.mubr.bf16.gmra.mrb[0].mxu0 %v191
  %v251 = vpop.f32.mrb[0].mxu0
  %v252 = vadd.f32 0.0, %v251
  %v253 = vpop.f32.mrb[0].mxu0
  %v254 = vpop.f32.mrb[0].mxu0
  %v255 = vpop.f32.mrb[0].mxu0
  %256 = vdwg.mxu0
  %v257 = vadd.f32 %v97, %v252
  %v258 = vxor.u32 %v257, 2147483648
  %v259 = vmul.f32 %v258, 1.442695
  %v260 = vpow.pop %v259
  %v261 = vadd.f32 %v260, 1.0
  %v262 = vrcp.pop %v261
  %v263 = vmul.f32 1.0, %v262
  %v264 = vmul.f32 %v263, 2.0
  %v265 = vsub.f32 %v264, 1.0
  %v266 = vmul.f32 %v263, %v138
  %268 = vrot.lane.b32.xlu0 %v265, 64
  %v269 = vpop.permute.xlu0 %268
  %v271 = vmul.f32 %v263, %v269
  %273 = vrot.lane.b32.xlu0 %v271, 32
  %v274 = vpop.permute.xlu0 %273
  %v276 = vadd.f32 %v266, %v274
  %v277 = vtanh.pop %v276
  %279 = vrot.lane.b32.xlu0 %v277, 64
  %v280 = vpop.permute.xlu0 %279
  %v282 = vmul.f32 %v263, %v280
  %v283 = vpack.c.bf16 %v282, %v282
  %285 = vrot.lane.b32.xlu0 %v283, 32
  %v286 = vpop.permute.xlu0 %285
  %v288 = vsel %vm189, %v286, 0
  %290 = vmatprep.subr.bf16.mxu0 0
  %291 = vmatpush1.bf16.xpose.msra.mxu0 %v194
  %292 = vmatprep.subr.bf16.mxu0 0
  %293 = vmatpush1.bf16.xpose.msra.mxu0 %v197
  %294 = vmatprep.subr.bf16.mxu0 0
  %295 = vmatpush1.bf16.xpose.msra.mxu0 %v200
  %296 = vmatprep.subr.bf16.mxu0 0
  %297 = vmatpush1.bf16.xpose.msra.mxu0 %v203
  %298 = vmatprep.subr.bf16.mxu0 0
  %299 = vmatpush1.bf16.xpose.msra.mxu0 %v206
  %300 = vmatprep.subr.bf16.mxu0 0
  %301 = vmatpush1.bf16.xpose.msra.mxu0 %v209
  %302 = vmatprep.subr.bf16.mxu0 0
  %303 = vmatpush1.bf16.xpose.msra.mxu0 %v212
  %304 = vmatprep.subr.bf16.mxu0 0
  %305 = vmatpush1.bf16.xpose.msra.mxu0 %v215
  %306 = vmatprep.subr.bf16.mxu0 0
  %307 = vmatpush1.bf16.xpose.msra.mxu0 0
  %308 = vmatprep.subr.bf16.mxu0 0
  %309 = vmatpush1.bf16.xpose.msra.mxu0 0
  %310 = vmatprep.subr.bf16.mxu0 0
  %311 = vmatpush1.bf16.xpose.msra.mxu0 0
  %312 = vmatprep.subr.bf16.mxu0 0
  %313 = vmatpush1.bf16.xpose.msra.mxu0 0
  %314 = vmatprep.subr.bf16.mxu0 0
  %315 = vmatpush1.bf16.xpose.msra.mxu0 0
  %316 = vmatprep.subr.bf16.mxu0 0
  %317 = vmatpush1.bf16.xpose.msra.mxu0 0
  %318 = vmatprep.subr.bf16.mxu0 0
  %319 = vmatpush1.bf16.xpose.msra.mxu0 0
  %320 = vmatprep.subr.bf16.mxu0 0
  %321 = vmatpush1.bf16.xpose.msra.mxu0 0
  %322 = vmatprep.mubr.bf16.mxu0 0
  %323 = vmatmul.mubr.bf16.gmra.mrb[0].mxu0 %v288
  %v324 = vpop.f32.mrb[0].mxu0
  %v325 = vadd.f32 0.0, %v324
  %v326 = vpop.f32.mrb[0].mxu0
  %v327 = vpop.f32.mrb[0].mxu0
  %v328 = vpop.f32.mrb[0].mxu0
  %329 = vdwg.mxu0
  %v330 = vadd.f32 %v98, %v325
  %v331 = vxor.u32 %v330, 2147483648
  %v332 = vmul.f32 %v331, 1.442695
  %v333 = vpow.pop %v332
  %v334 = vadd.f32 %v333, 1.0
  %v335 = vrcp.pop %v334
  %v336 = vmul.f32 1.0, %v335
  %v337 = vmul.f32 %v336, 2.0
  %v338 = vsub.f32 %v337, 1.0
  %v339 = vmul.f32 %v336, %v276
  %341 = vrot.lane.b32.xlu0 %v338, 64
  %v342 = vpop.permute.xlu0 %341
  %v344 = vmul.f32 %v336, %v342
  %346 = vrot.lane.b32.xlu0 %v344, 32
  %v347 = vpop.permute.xlu0 %346
  %v349 = vadd.f32 %v339, %v347
  %v350 = vtanh.pop %v349
  %352 = vrot.lane.b32.xlu0 %v350, 64
  %v353 = vpop.permute.xlu0 %352
  %v355 = vmul.f32 %v336, %v353
  %v356 = vpack.c.bf16 %v355, %v355
  %358 = vrot.lane.b32.xlu0 %v356, 32
  %v359 = vpop.permute.xlu0 %358
  %v361 = vsel %vm189, %v359, 0
  %363 = vmatprep.subr.bf16.mxu0 0
  %364 = vmatpush1.bf16.xpose.msra.mxu0 %v194
  %365 = vmatprep.subr.bf16.mxu0 0
  %366 = vmatpush1.bf16.xpose.msra.mxu0 %v197
  %367 = vmatprep.subr.bf16.mxu0 0
  %368 = vmatpush1.bf16.xpose.msra.mxu0 %v200
  %369 = vmatprep.subr.bf16.mxu0 0
  %370 = vmatpush1.bf16.xpose.msra.mxu0 %v203
  %371 = vmatprep.subr.bf16.mxu0 0
  %372 = vmatpush1.bf16.xpose.msra.mxu0 %v206
  %373 = vmatprep.subr.bf16.mxu0 0
  %374 = vmatpush1.bf16.xpose.msra.mxu0 %v209
  %375 = vmatprep.subr.bf16.mxu0 0
  %376 = vmatpush1.bf16.xpose.msra.mxu0 %v212
  %377 = vmatprep.subr.bf16.mxu0 0
  %378 = vmatpush1.bf16.xpose.msra.mxu0 %v215
  %379 = vmatprep.subr.bf16.mxu0 0
  %380 = vmatpush1.bf16.xpose.msra.mxu0 0
  %381 = vmatprep.subr.bf16.mxu0 0
  %382 = vmatpush1.bf16.xpose.msra.mxu0 0
  %383 = vmatprep.subr.bf16.mxu0 0
  %384 = vmatpush1.bf16.xpose.msra.mxu0 0
  %385 = vmatprep.subr.bf16.mxu0 0
  %386 = vmatpush1.bf16.xpose.msra.mxu0 0
  %387 = vmatprep.subr.bf16.mxu0 0
  %388 = vmatpush1.bf16.xpose.msra.mxu0 0
  %389 = vmatprep.subr.bf16.mxu0 0
  %390 = vmatpush1.bf16.xpose.msra.mxu0 0
  %391 = vmatprep.subr.bf16.mxu0 0
  %392 = vmatpush1.bf16.xpose.msra.mxu0 0
  %393 = vmatprep.subr.bf16.mxu0 0
  %394 = vmatpush1.bf16.xpose.msra.mxu0 0
  %395 = vmatprep.mubr.bf16.mxu0 0
  %396 = vmatmul.mubr.bf16.gmra.mrb[0].mxu0 %v361
  %v397 = vpop.f32.mrb[0].mxu0
  %v398 = vadd.f32 0.0, %v397
  %v399 = vpop.f32.mrb[0].mxu0
  %v400 = vpop.f32.mrb[0].mxu0
  %v401 = vpop.f32.mrb[0].mxu0
  %402 = vdwg.mxu0
  %v403 = vadd.f32 %v99, %v398
  %v404 = vxor.u32 %v403, 2147483648
  %v405 = vmul.f32 %v404, 1.442695
  %v406 = vpow.pop %v405
  %v407 = vadd.f32 %v406, 1.0
  %v408 = vrcp.pop %v407
  %v409 = vmul.f32 1.0, %v408
  %v410 = vmul.f32 %v409, 2.0
  %v411 = vsub.f32 %v410, 1.0
  %v412 = vmul.f32 %v409, %v349
  %414 = vrot.lane.b32.xlu0 %v411, 64
  %v415 = vpop.permute.xlu0 %414
  %v417 = vmul.f32 %v409, %v415
  %419 = vrot.lane.b32.xlu0 %v417, 32
  %v420 = vpop.permute.xlu0 %419
  %v422 = vadd.f32 %v412, %v420
  %v423 = vtanh.pop %v422
  %425 = vrot.lane.b32.xlu0 %v423, 64
  %v426 = vpop.permute.xlu0 %425
  %v428 = vmul.f32 %v409, %v426
  %v429 = vpack.c.bf16 %v428, %v428
  %431 = vrot.lane.b32.xlu0 %v429, 32
  %v432 = vpop.permute.xlu0 %431
  %v434 = vsel %vm189, %v432, 0
  %436 = vmatprep.subr.bf16.mxu0 0
  %437 = vmatpush1.bf16.xpose.msra.mxu0 %v194
  %438 = vmatprep.subr.bf16.mxu0 0
  %439 = vmatpush1.bf16.xpose.msra.mxu0 %v197
  %440 = vmatprep.subr.bf16.mxu0 0
  %441 = vmatpush1.bf16.xpose.msra.mxu0 %v200
  %442 = vmatprep.subr.bf16.mxu0 0
  %443 = vmatpush1.bf16.xpose.msra.mxu0 %v203
  %444 = vmatprep.subr.bf16.mxu0 0
  %445 = vmatpush1.bf16.xpose.msra.mxu0 %v206
  %446 = vmatprep.subr.bf16.mxu0 0
  %447 = vmatpush1.bf16.xpose.msra.mxu0 %v209
  %448 = vmatprep.subr.bf16.mxu0 0
  %449 = vmatpush1.bf16.xpose.msra.mxu0 %v212
  %450 = vmatprep.subr.bf16.mxu0 0
  %451 = vmatpush1.bf16.xpose.msra.mxu0 %v215
  %452 = vmatprep.subr.bf16.mxu0 0
  %453 = vmatpush1.bf16.xpose.msra.mxu0 0
  %454 = vmatprep.subr.bf16.mxu0 0
  %455 = vmatpush1.bf16.xpose.msra.mxu0 0
  %456 = vmatprep.subr.bf16.mxu0 0
  %457 = vmatpush1.bf16.xpose.msra.mxu0 0
  %458 = vmatprep.subr.bf16.mxu0 0
  %459 = vmatpush1.bf16.xpose.msra.mxu0 0
  %460 = vmatprep.subr.bf16.mxu0 0
  %461 = vmatpush1.bf16.xpose.msra.mxu0 0
  %462 = vmatprep.subr.bf16.mxu0 0
  %463 = vmatpush1.bf16.xpose.msra.mxu0 0
  %464 = vmatprep.subr.bf16.mxu0 0
  %465 = vmatpush1.bf16.xpose.msra.mxu0 0
  %466 = vmatprep.subr.bf16.mxu0 0
  %467 = vmatpush1.bf16.xpose.msra.mxu0 0
  %468 = vmatprep.mubr.bf16.mxu0 0
  %469 = vmatmul.mubr.bf16.gmra.mrb[0].mxu0 %v434
  %v470 = vpop.f32.mrb[0].mxu0
  %v471 = vadd.f32 0.0, %v470
  %v472 = vpop.f32.mrb[0].mxu0
  %v473 = vpop.f32.mrb[0].mxu0
  %v474 = vpop.f32.mrb[0].mxu0
  %475 = vdwg.mxu0
  %v476 = vadd.f32 %v100, %v471
  %v477 = vxor.u32 %v476, 2147483648
  %v478 = vmul.f32 %v477, 1.442695
  %v479 = vpow.pop %v478
  %v480 = vadd.f32 %v479, 1.0
  %v481 = vrcp.pop %v480
  %v482 = vmul.f32 1.0, %v481
  %v483 = vmul.f32 %v482, 2.0
  %v484 = vsub.f32 %v483, 1.0
  %v485 = vmul.f32 %v482, %v422
  %487 = vrot.lane.b32.xlu0 %v484, 64
  %v488 = vpop.permute.xlu0 %487
  %v490 = vmul.f32 %v482, %v488
  %492 = vrot.lane.b32.xlu0 %v490, 32
  %v493 = vpop.permute.xlu0 %492
  %v495 = vadd.f32 %v485, %v493
  %v496 = vtanh.pop %v495
  %498 = vrot.lane.b32.xlu0 %v496, 64
  %v499 = vpop.permute.xlu0 %498
  %v501 = vmul.f32 %v482, %v499
  %v502 = vpack.c.bf16 %v501, %v501
  %504 = vrot.lane.b32.xlu0 %v502, 32
  %v505 = vpop.permute.xlu0 %504
  %v507 = vsel %vm189, %v505, 0
  %509 = vmatprep.subr.bf16.mxu0 0
  %510 = vmatpush1.bf16.xpose.msra.mxu0 %v194
  %511 = vmatprep.subr.bf16.mxu0 0
  %512 = vmatpush1.bf16.xpose.msra.mxu0 %v197
  %513 = vmatprep.subr.bf16.mxu0 0
  %514 = vmatpush1.bf16.xpose.msra.mxu0 %v200
  %515 = vmatprep.subr.bf16.mxu0 0
  %516 = vmatpush1.bf16.xpose.msra.mxu0 %v203
  %517 = vmatprep.subr.bf16.mxu0 0
  %518 = vmatpush1.bf16.xpose.msra.mxu0 %v206
  %519 = vmatprep.subr.bf16.mxu0 0
  %520 = vmatpush1.bf16.xpose.msra.mxu0 %v209
  %521 = vmatprep.subr.bf16.mxu0 0
  %522 = vmatpush1.bf16.xpose.msra.mxu0 %v212
  %523 = vmatprep.subr.bf16.mxu0 0
  %524 = vmatpush1.bf16.xpose.msra.mxu0 %v215
  %525 = vmatprep.subr.bf16.mxu0 0
  %526 = vmatpush1.bf16.xpose.msra.mxu0 0
  %527 = vmatprep.subr.bf16.mxu0 0
  %528 = vmatpush1.bf16.xpose.msra.mxu0 0
  %529 = vmatprep.subr.bf16.mxu0 0
  %530 = vmatpush1.bf16.xpose.msra.mxu0 0
  %531 = vmatprep.subr.bf16.mxu0 0
  %532 = vmatpush1.bf16.xpose.msra.mxu0 0
  %533 = vmatprep.subr.bf16.mxu0 0
  %534 = vmatpush1.bf16.xpose.msra.mxu0 0
  %535 = vmatprep.subr.bf16.mxu0 0
  %536 = vmatpush1.bf16.xpose.msra.mxu0 0
  %537 = vmatprep.subr.bf16.mxu0 0
  %538 = vmatpush1.bf16.xpose.msra.mxu0 0
  %539 = vmatprep.subr.bf16.mxu0 0
  %540 = vmatpush1.bf16.xpose.msra.mxu0 0
  %541 = vmatprep.mubr.bf16.mxu0 0
  %542 = vmatmul.mubr.bf16.gmra.mrb[0].mxu0 %v507
  %v543 = vpop.f32.mrb[0].mxu0
  %v544 = vadd.f32 0.0, %v543
  %v545 = vpop.f32.mrb[0].mxu0
  %v546 = vpop.f32.mrb[0].mxu0
  %v547 = vpop.f32.mrb[0].mxu0
  %548 = vdwg.mxu0
  %v549 = vadd.f32 %v101, %v544
  %v550 = vxor.u32 %v549, 2147483648
  %v551 = vmul.f32 %v550, 1.442695
  %v552 = vpow.pop %v551
  %v553 = vadd.f32 %v552, 1.0
  %v554 = vrcp.pop %v553
  %v555 = vmul.f32 1.0, %v554
  %v556 = vmul.f32 %v555, 2.0
  %v557 = vsub.f32 %v556, 1.0
  %v558 = vmul.f32 %v555, %v495
  %560 = vrot.lane.b32.xlu0 %v557, 64
  %v561 = vpop.permute.xlu0 %560
  %v563 = vmul.f32 %v555, %v561
  %565 = vrot.lane.b32.xlu0 %v563, 32
  %v566 = vpop.permute.xlu0 %565
  %v568 = vadd.f32 %v558, %v566
  %v569 = vtanh.pop %v568
  %571 = vrot.lane.b32.xlu0 %v569, 64
  %v572 = vpop.permute.xlu0 %571
  %v574 = vmul.f32 %v555, %v572
  %v575 = vpack.c.bf16 %v574, %v574
  %577 = vrot.lane.b32.xlu0 %v575, 32
  %v578 = vpop.permute.xlu0 %577
  %v580 = vsel %vm189, %v578, 0
  %582 = vmatprep.subr.bf16.mxu0 0
  %583 = vmatpush1.bf16.xpose.msra.mxu0 %v194
  %584 = vmatprep.subr.bf16.mxu0 0
  %585 = vmatpush1.bf16.xpose.msra.mxu0 %v197
  %586 = vmatprep.subr.bf16.mxu0 0
  %587 = vmatpush1.bf16.xpose.msra.mxu0 %v200
  %588 = vmatprep.subr.bf16.mxu0 0
  %589 = vmatpush1.bf16.xpose.msra.mxu0 %v203
  %590 = vmatprep.subr.bf16.mxu0 0
  %591 = vmatpush1.bf16.xpose.msra.mxu0 %v206
  %592 = vmatprep.subr.bf16.mxu0 0
  %593 = vmatpush1.bf16.xpose.msra.mxu0 %v209
  %594 = vmatprep.subr.bf16.mxu0 0
  %595 = vmatpush1.bf16.xpose.msra.mxu0 %v212
  %596 = vmatprep.subr.bf16.mxu0 0
  %597 = vmatpush1.bf16.xpose.msra.mxu0 %v215
  %598 = vmatprep.subr.bf16.mxu0 0
  %599 = vmatpush1.bf16.xpose.msra.mxu0 0
  %600 = vmatprep.subr.bf16.mxu0 0
  %601 = vmatpush1.bf16.xpose.msra.mxu0 0
  %602 = vmatprep.subr.bf16.mxu0 0
  %603 = vmatpush1.bf16.xpose.msra.mxu0 0
  %604 = vmatprep.subr.bf16.mxu0 0
  %605 = vmatpush1.bf16.xpose.msra.mxu0 0
  %606 = vmatprep.subr.bf16.mxu0 0
  %607 = vmatpush1.bf16.xpose.msra.mxu0 0
  %608 = vmatprep.subr.bf16.mxu0 0
  %609 = vmatpush1.bf16.xpose.msra.mxu0 0
  %610 = vmatprep.subr.bf16.mxu0 0
  %611 = vmatpush1.bf16.xpose.msra.mxu0 0
  %612 = vmatprep.subr.bf16.mxu0 0
  %613 = vmatpush1.bf16.xpose.msra.mxu0 0
  %614 = vmatprep.mubr.bf16.mxu0 0
  %615 = vmatmul.mubr.bf16.gmra.mrb[0].mxu0 %v580
  %v616 = vpop.f32.mrb[0].mxu0
  %v617 = vadd.f32 0.0, %v616
  %v618 = vpop.f32.mrb[0].mxu0
  %v619 = vpop.f32.mrb[0].mxu0
  %v620 = vpop.f32.mrb[0].mxu0
  %621 = vdwg.mxu0
  %v622 = vadd.f32 %v102, %v617
  %v623 = vxor.u32 %v622, 2147483648
  %v624 = vmul.f32 %v623, 1.442695
  %v625 = vpow.pop %v624
  %v626 = vadd.f32 %v625, 1.0
  %v627 = vrcp.pop %v626
  %v628 = vmul.f32 1.0, %v627
  %v629 = vmul.f32 %v628, 2.0
  %v630 = vsub.f32 %v629, 1.0
  %v631 = vmul.f32 %v628, %v568
  %633 = vrot.lane.b32.xlu0 %v630, 64
  %v634 = vpop.permute.xlu0 %633
  %v636 = vmul.f32 %v628, %v634
  %638 = vrot.lane.b32.xlu0 %v636, 32
  %v639 = vpop.permute.xlu0 %638
  %v641 = vadd.f32 %v631, %v639
  %v642 = vtanh.pop %v641
  %644 = vrot.lane.b32.xlu0 %v642, 64
  %v645 = vpop.permute.xlu0 %644
  %v647 = vmul.f32 %v628, %v645
  %v648 = vpack.c.bf16 %v647, %v647
  %650 = vrot.lane.b32.xlu0 %v648, 32
  %v651 = vpop.permute.xlu0 %650
  %v653 = vsel %vm189, %v651, 0
  %655 = vmatprep.subr.bf16.mxu0 0
  %656 = vmatpush1.bf16.xpose.msra.mxu0 %v194
  %657 = vmatprep.subr.bf16.mxu0 0
  %658 = vmatpush1.bf16.xpose.msra.mxu0 %v197
  %659 = vmatprep.subr.bf16.mxu0 0
  %660 = vmatpush1.bf16.xpose.msra.mxu0 %v200
  %661 = vmatprep.subr.bf16.mxu0 0
  %662 = vmatpush1.bf16.xpose.msra.mxu0 %v203
  %663 = vmatprep.subr.bf16.mxu0 0
  %664 = vmatpush1.bf16.xpose.msra.mxu0 %v206
  %665 = vmatprep.subr.bf16.mxu0 0
  %666 = vmatpush1.bf16.xpose.msra.mxu0 %v209
  %667 = vmatprep.subr.bf16.mxu0 0
  %668 = vmatpush1.bf16.xpose.msra.mxu0 %v212
  %669 = vmatprep.subr.bf16.mxu0 0
  %670 = vmatpush1.bf16.xpose.msra.mxu0 %v215
  %671 = vmatprep.subr.bf16.mxu0 0
  %672 = vmatpush1.bf16.xpose.msra.mxu0 0
  %673 = vmatprep.subr.bf16.mxu0 0
  %674 = vmatpush1.bf16.xpose.msra.mxu0 0
  %675 = vmatprep.subr.bf16.mxu0 0
  %676 = vmatpush1.bf16.xpose.msra.mxu0 0
  %677 = vmatprep.subr.bf16.mxu0 0
  %678 = vmatpush1.bf16.xpose.msra.mxu0 0
  %679 = vmatprep.subr.bf16.mxu0 0
  %680 = vmatpush1.bf16.xpose.msra.mxu0 0
  %681 = vmatprep.subr.bf16.mxu0 0
  %682 = vmatpush1.bf16.xpose.msra.mxu0 0
  %683 = vmatprep.subr.bf16.mxu0 0
  %684 = vmatpush1.bf16.xpose.msra.mxu0 0
  %685 = vmatprep.subr.bf16.mxu0 0
  %686 = vmatpush1.bf16.xpose.msra.mxu0 0
  %687 = vmatprep.mubr.bf16.mxu0 0
  %688 = vmatmul.mubr.bf16.gmra.mrb[0].mxu0 %v653
  %v689 = vpop.f32.mrb[0].mxu0
  %v690 = vadd.f32 0.0, %v689
  %v691 = vpop.f32.mrb[0].mxu0
  %v692 = vpop.f32.mrb[0].mxu0
  %v693 = vpop.f32.mrb[0].mxu0
  %694 = vdwg.mxu0
  %v695 = vadd.f32 %v103, %v690
  %v696 = vxor.u32 %v695, 2147483648
  %v697 = vmul.f32 %v696, 1.442695
  %v698 = vpow.pop %v697
  %v699 = vadd.f32 %v698, 1.0
  %v700 = vrcp.pop %v699
  %v701 = vmul.f32 1.0, %v700
  %v702 = vmul.f32 %v701, 2.0
  %v703 = vsub.f32 %v702, 1.0
  %v704 = vmul.f32 %v701, %v641
  %706 = vrot.lane.b32.xlu0 %v703, 64
  %v707 = vpop.permute.xlu0 %706
  %v709 = vmul.f32 %v701, %v707
  %711 = vrot.lane.b32.xlu0 %v709, 32
  %v712 = vpop.permute.xlu0 %711
  %v714 = vadd.f32 %v704, %v712
  %v715 = vtanh.pop %v714
  %717 = vrot.lane.b32.xlu0 %v715, 64
  %v718 = vpop.permute.xlu0 %717
  %v720 = vmul.f32 %v701, %v718
  %v721 = vld [vmem:[%s4] sm:$0x1]
  %v723 = vlaneseq
  %v724 = vshrl.u32 %v723, 7
  %v725 = vsub.s32 0, %v724
  %v726 = vrot.slane %v721, %v725
  %727 = vrot.lane.b32.xlu0 %v726, 96
  %v728 = vpop.permute.xlu0 %727
  %v730 = vmul.f32 %v720, %v728
  %732 = vrot.lane.b32.xlu0 %v730, 32
  %v733 = vpop.permute.xlu0 %732
  %v735 = vsel %vm189, %v733, 0.0
  %736 = vadd.xlane.f32.xlu0 %v735
  %v737 = vpop.xlane.xlu0 %736
  %v738 = vld [vmem:[#allocation2] sm:$0x1]
  %v740 = vlaneseq
  %v741 = vshrl.u32 %v740, 7
  %v742 = vsub.s32 0, %v741
  %v743 = vrot.slane %v738, %v742
  %v745 = vadd.f32 %v737, %v743
  %vm746 = vcmask 7168
  %747 = vst.msk [vmem:[%s6] sm:$0xff] %vm746, %v745
  // Predicated region
  $region26: #{tpu_custom_call.1} parent=0 // pred_check
    _
  $region27: #{tpu_custom_call.1} parent=0 // pred_check_branch
    %749 = sbr.rel (0) target = $region29
  $region28: #{tpu_custom_call.1} parent=0 // pred_region
    _
  $region29: #{tpu_custom_call.1} parent=0 // pred_fallthru
    _
  // Predicated region
  $region30: #{tpu_custom_call.1} parent=0 // pred_check
    _
  $region31: #{tpu_custom_call.1} parent=0 // pred_check_branch
    %751 = sbr.rel (0) target = $region33
  $region32: #{tpu_custom_call.1} parent=0 // pred_region
    _
  $region33: #{tpu_custom_call.1} parent=0 // pred_fallthru
    _

</llo_original>
